<compile_context>
chip_gen: v7x
topology: tpu7x:2x2x1
jax: 0.10.0
libtpu: 0.0.40
codegen_flags: <defaults>
</compile_context>

<pallas_src>
import functools
import math

import jax
import jax.numpy as jnp
from jax import lax
from jax.experimental import pallas as pl
from jax.experimental.pallas import tpu as pltpu


def _pos_emb_kernel(t_ref, w1s_ref, w1c_ref, b1_ref, w2_ref, b2_ref, o_ref,
                    *, half, neg_log_scale, compute_dtype):
    # t_ref  : (1, TILE_N)        positions, lane-dense
    # w1s_ref: (hidden, half)     conv1 weight, sin half (PyTorch (out, in) layout)
    # w1c_ref: (hidden, half)     conv1 weight, cos half
    # b1_ref : (hidden, 1)        f32
    # w2_ref : (out_dim, hidden)  conv2 weight
    # b2_ref : (out_dim, 1)       f32
    # o_ref  : (out_dim, TILE_N)  lane-dense output block
    t = t_ref[...]                                                  # (1, TILE_N) f32

    # Frequencies computed in-kernel: exp(-log(10000) * i / (half - 1)). EUP.
    idx = lax.broadcasted_iota(jnp.int32, (half, 1), 0).astype(jnp.float32)
    freqs = jnp.exp(idx * neg_log_scale)                            # (half, 1)

    arg = freqs * t                                                 # (half, TILE_N)
    s = jnp.sin(arg)                                                # f32 transcendentals
    c = jnp.cos(arg)

    # 1x1 conv1d == channel matmul per position; concat-free via split weights.
    # Only the MXU operands are cast to compute_dtype; accumulation stays f32.
    h = (jnp.dot(w1s_ref[...], s.astype(compute_dtype),
                 preferred_element_type=jnp.float32)
         + jnp.dot(w1c_ref[...], c.astype(compute_dtype),
                   preferred_element_type=jnp.float32)
         + b1_ref[...])                                             # (hidden, TILE_N) f32
    h = h * jax.nn.sigmoid(h)                                       # SiLU (EUP sigmoid), f32

    out = (jnp.dot(w2_ref[...], h.astype(compute_dtype),
                   preferred_element_type=jnp.float32)
           + b2_ref[...])                                           # (out_dim, TILE_N) f32

    # Single full-block, lane-dense store (no per-batch slicing / rotation).
    o_ref[...] = out.astype(o_ref.dtype)


def positional_embedding_1d(temp, conv1_w, conv1_b, conv2_w, conv2_b, embedding_dim,
                            *, compute_dtype=jnp.float32, out_dtype=jnp.float32,
                            tile_n=8192):
    """temp: (B, 1, L) f32; PyTorch-layout conv weights -> (B, output_dim, L)."""
    B, t_dim, L = temp.shape
    assert t_dim == 1, "this kernel implements the default pos_dim=1"
    assert embedding_dim % 2 == 0, "embedding_dim must be even (half sin / half cos)"
    assert tile_n % 128 == 0, "lane tile must be a multiple of 128"
    N = B * L
    half = embedding_dim // 2
    hidden = conv1_w.shape[0]
    out_dim = conv2_w.shape[0]
    assert conv1_w.shape == (hidden, embedding_dim)
    assert conv2_w.shape == (out_dim, hidden)

    # Guard half == 1 (PyTorch would divide by zero for embedding_dim == 2).
    neg_log_scale = -math.log(10000.0) / max(half - 1, 1)

    # Split conv1 weight so the kernel never concatenates sin/cos embeddings;
    # cast weights once in the wrapper to the requested MXU operand dtype.
    w1_sin = conv1_w[:, :half].astype(compute_dtype)                # (hidden, half)
    w1_cos = conv1_w[:, half:].astype(compute_dtype)                # (hidden, half)
    w2 = conv2_w.astype(compute_dtype)                              # (out_dim, hidden)
    b1 = conv1_b.reshape(hidden, 1).astype(jnp.float32)
    b2 = conv2_b.reshape(out_dim, 1).astype(jnp.float32)

    # (B, 1, L) -> (1, B*L): pure reshape (t_dim == 1), lane-dense positions row.
    t_row = temp.reshape(1, N).astype(jnp.float32)

    # Lane tiling: small N -> one full-width block (block == full array dim is
    # always legal); large N -> pad positions up to a multiple of tile_n and
    # pipeline over lane tiles.
    if N <= tile_n:
        tile = N
        n_pad = N
    else:
        tile = tile_n
        n_pad = pl.cdiv(N, tile) * tile
        if n_pad != N:
            t_row = jnp.pad(t_row, ((0, 0), (0, n_pad - N)))
    grid = (n_pad // tile,)

    kernel = functools.partial(_pos_emb_kernel, half=half,
                               neg_log_scale=neg_log_scale,
                               compute_dtype=compute_dtype)

    out_flat = pl.pallas_call(
        kernel,
        out_shape=jax.ShapeDtypeStruct((out_dim, n_pad), out_dtype),
        grid_spec=pltpu.PrefetchScalarGridSpec(
            num_scalar_prefetch=0,
            grid=grid,                                       # position/lane tiles
            in_specs=[
                pl.BlockSpec((1, tile), lambda i: (0, i)),           # positions: tiled
                pl.BlockSpec((hidden, half), lambda i: (0, 0)),      # weights: resident
                pl.BlockSpec((hidden, half), lambda i: (0, 0)),
                pl.BlockSpec((hidden, 1), lambda i: (0, 0)),
                pl.BlockSpec((out_dim, hidden), lambda i: (0, 0)),
                pl.BlockSpec((out_dim, 1), lambda i: (0, 0)),
            ],
            out_specs=pl.BlockSpec((out_dim, tile), lambda i: (0, i)),
        ),
        compiler_params=pltpu.CompilerParams(
            dimension_semantics=("parallel",),               # v7x: split lanes over TCs
            vmem_limit_bytes=48 * 1024 * 1024,               # within v7x's 64 MiB per-TC VMEM
        ),
    )(t_row, w1_sin, w1_cos, b1, w2, b2)

    # Wrapper-side NCL assembly (cheap XLA reshape/transpose, keeps the kernel
    # store lane-dense): (out_dim, B*L) -> (B, out_dim, L).
    out = out_flat[:, :N].reshape(out_dim, B, L)
    return jnp.transpose(out, (1, 0, 2))


def _reference(temp, conv1_w, conv1_b, conv2_w, conv2_b, embedding_dim):
    # Pure-JAX reference mirroring the PyTorch forward.
    B, _, L = temp.shape
    half = embedding_dim // 2
    denom = max(half - 1, 1)
    freqs = jnp.exp(-math.log(10000.0) * jnp.arange(half, dtype=jnp.float32) / denom)
    t = jnp.transpose(temp, (0, 2, 1)).reshape(B * L, 1)            # (N, 1)
    arg = t * freqs[None, :]                                        # (N, half)
    emb = jnp.concatenate([jnp.sin(arg), jnp.cos(arg)], axis=-1)    # (N, emb_dim)
    h = emb @ conv1_w.T + conv1_b                                   # (N, hidden)
    h = jax.nn.silu(h)
    out = h @ conv2_w.T + conv2_b                                   # (N, out_dim)
    return jnp.transpose(out.reshape(B, L, -1), (0, 2, 1))          # (B, out_dim, L)


if __name__ == "__main__":
    # Module config (pos_dim=1).
    embedding_dim = 32
    hidden_dim = 64
    output_dim = 32
    B, L = 2, 16                                   # bsz, height

    key = jax.random.PRNGKey(0)
    k_t, k_w1, k_b1, k_w2, k_b2 = jax.random.split(key, 5)

    # Input: (bsz, t_dim=1, height)
    temp = jax.random.uniform(k_t, (B, 1, L), jnp.float32) * 10.0

    # Parameters in native PyTorch conv1d layout ((out, in), kernel_size=1 squeezed).
    conv1_w = jax.random.normal(k_w1, (hidden_dim, embedding_dim), jnp.float32) * 0.05
    conv1_b = jax.random.normal(k_b1, (hidden_dim,), jnp.float32) * 0.05
    conv2_w = jax.random.normal(k_w2, (output_dim, hidden_dim), jnp.float32) * 0.05
    conv2_b = jax.random.normal(k_b2, (output_dim,), jnp.float32) * 0.05

    ref = _reference(temp, conv1_w, conv1_b, conv2_w, conv2_b, embedding_dim)

    # 1) Default (f32 MXU operands) path -- exact match expected.
    out = positional_embedding_1d(temp, conv1_w, conv1_b, conv2_w, conv2_b, embedding_dim)
    out = jax.block_until_ready(out)
    if out.shape != (B, output_dim, L):
        raise AssertionError(f"bad output shape {out.shape}")
    if not jnp.allclose(out, ref, atol=1e-4, rtol=1e-4):
        err = float(jnp.max(jnp.abs(out - ref)))
        raise AssertionError(f"f32 kernel output does not match reference (max abs err {err})")

    # 2) bf16-MXU path (v6e/v7x scaled-N mode) -- looser tolerance.
    out_bf16 = positional_embedding_1d(temp, conv1_w, conv1_b, conv2_w, conv2_b,
                                       embedding_dim, compute_dtype=jnp.bfloat16)
    out_bf16 = jax.block_until_ready(out_bf16)
    if not jnp.allclose(out_bf16, ref, atol=3e-2, rtol=3e-2):
        err = float(jnp.max(jnp.abs(out_bf16 - ref)))
        raise AssertionError(f"bf16 kernel output does not match reference (max abs err {err})")

    # 3) Multi-tile path (padding + grid > 1 + pipelining), still small shapes.
    B2, L2 = 2, 200                                 # N = 400 -> padded to 512 with tile 128
    temp2 = jax.random.uniform(jax.random.PRNGKey(1), (B2, 1, L2), jnp.float32) * 10.0
    out2 = positional_embedding_1d(temp2, conv1_w, conv1_b, conv2_w, conv2_b,
                                   embedding_dim, tile_n=128)
    out2 = jax.block_until_ready(out2)
    ref2 = _reference(temp2, conv1_w, conv1_b, conv2_w, conv2_b, embedding_dim)
    if out2.shape != (B2, output_dim, L2):
        raise AssertionError(f"bad tiled output shape {out2.shape}")
    if not jnp.allclose(out2, ref2, atol=1e-4, rtol=1e-4):
        err = float(jnp.max(jnp.abs(out2 - ref2)))
        raise AssertionError(f"tiled kernel output does not match reference (max abs err {err})")

    print("KERNEL_OK")
</pallas_src>

<mosaic_0001>
module attributes {stable_mosaic.version = 11 : i64} {
  func.func @_pos_emb_kernel(%arg0: i32, %arg1: memref<1x32xf32, #tpu.memory_space<vmem>>, %arg2: memref<64x16xf32, #tpu.memory_space<vmem>>, %arg3: memref<64x16xf32, #tpu.memory_space<vmem>>, %arg4: memref<64x1xf32, #tpu.memory_space<vmem>>, %arg5: memref<32x64xf32, #tpu.memory_space<vmem>>, %arg6: memref<32x1xf32, #tpu.memory_space<vmem>>, %arg7: memref<32x32xf32, #tpu.memory_space<vmem>>) attributes {dimension_semantics = [#tpu.dimension_semantics<parallel>], iteration_bounds = array<i64: 1>, scalar_prefetch = 0 : i64, scratch_operands = 0 : i64, tpu.core_type = #tpu.core_type<tc>, window_params = [{transform_indices = @transform_0, window_bounds = array<i64: 1, 32>}, {pipeline_mode = #tpu.pipeline_mode<synchronous>, transform_indices = @transform_1, window_bounds = array<i64: 64, 16>}, {pipeline_mode = #tpu.pipeline_mode<synchronous>, transform_indices = @transform_2, window_bounds = array<i64: 64, 16>}, {pipeline_mode = #tpu.pipeline_mode<synchronous>, transform_indices = @transform_3, window_bounds = array<i64: 64, 1>}, {pipeline_mode = #tpu.pipeline_mode<synchronous>, transform_indices = @transform_4, window_bounds = array<i64: 32, 64>}, {pipeline_mode = #tpu.pipeline_mode<synchronous>, transform_indices = @transform_5, window_bounds = array<i64: 32, 1>}, {transform_indices = @transform_6, window_bounds = array<i64: 32, 32>}]} {
    %c0 = arith.constant 0 : index
    %c0_0 = arith.constant 0 : index
    %0 = vector.load %arg1[%c0, %c0_0] : memref<1x32xf32, #tpu.memory_space<vmem>>, vector<1x32xf32>
    %1 = tpu.iota {dimensions = array<i32: 0>} : vector<16x1xi32>
    %2 = arith.sitofp %1 : vector<16x1xi32> to vector<16x1xf32>
    %cst = arith.constant -0.614022672 : f32
    %3 = vector.broadcast %cst : f32 to vector<16x1xf32>
    %4 = arith.mulf %2, %3 : vector<16x1xf32>
    %5 = math.exp %4 : vector<16x1xf32>
    %6 = vector.broadcast %5 : vector<16x1xf32> to vector<16x32xf32>
    %7 = vector.broadcast %0 : vector<1x32xf32> to vector<16x32xf32>
    %8 = arith.mulf %6, %7 : vector<16x32xf32>
    %9 = math.sin %8 : vector<16x32xf32>
    %10 = math.cos %8 : vector<16x32xf32>
    %c0_1 = arith.constant 0 : index
    %c0_2 = arith.constant 0 : index
    %11 = vector.load %arg2[%c0_1, %c0_2] : memref<64x16xf32, #tpu.memory_space<vmem>>, vector<64x16xf32>
    %cst_3 = arith.constant dense<0.000000e+00> : vector<64x32xf32>
    %12 = tpu.matmul %11, %9, %cst_3 {dimension_numbers = #tpu.dot_dimension_numbers<[1], [0], [0], [1], [0, 0, 1, 1], [], []>} : vector<64x16xf32>, vector<16x32xf32>, vector<64x32xf32> -> vector<64x32xf32>
    %c0_4 = arith.constant 0 : index
    %c0_5 = arith.constant 0 : index
    %13 = vector.load %arg3[%c0_4, %c0_5] : memref<64x16xf32, #tpu.memory_space<vmem>>, vector<64x16xf32>
    %cst_6 = arith.constant dense<0.000000e+00> : vector<64x32xf32>
    %14 = tpu.matmul %13, %10, %cst_6 {dimension_numbers = #tpu.dot_dimension_numbers<[1], [0], [0], [1], [0, 0, 1, 1], [], []>} : vector<64x16xf32>, vector<16x32xf32>, vector<64x32xf32> -> vector<64x32xf32>
    %15 = arith.addf %12, %14 : vector<64x32xf32>
    %c0_7 = arith.constant 0 : index
    %c0_8 = arith.constant 0 : index
    %16 = vector.load %arg4[%c0_7, %c0_8] : memref<64x1xf32, #tpu.memory_space<vmem>>, vector<64x1xf32>
    %17 = vector.broadcast %16 : vector<64x1xf32> to vector<64x32xf32>
    %18 = arith.addf %15, %17 : vector<64x32xf32>
    %19 = arith.negf %18 : vector<64x32xf32>
    %20 = math.exp %19 : vector<64x32xf32>
    %cst_9 = arith.constant 1.000000e+00 : f32
    %21 = vector.broadcast %cst_9 : f32 to vector<64x32xf32>
    %22 = arith.addf %21, %20 : vector<64x32xf32>
    %23 = arith.divf %21, %22 : vector<64x32xf32>
    %24 = arith.mulf %18, %23 : vector<64x32xf32>
    %c0_10 = arith.constant 0 : index
    %c0_11 = arith.constant 0 : index
    %25 = vector.load %arg5[%c0_10, %c0_11] : memref<32x64xf32, #tpu.memory_space<vmem>>, vector<32x64xf32>
    %cst_12 = arith.constant dense<0.000000e+00> : vector<32x32xf32>
    %26 = tpu.matmul %25, %24, %cst_12 {dimension_numbers = #tpu.dot_dimension_numbers<[1], [0], [0], [1], [0, 0, 1, 1], [], []>} : vector<32x64xf32>, vector<64x32xf32>, vector<32x32xf32> -> vector<32x32xf32>
    %c0_13 = arith.constant 0 : index
    %c0_14 = arith.constant 0 : index
    %27 = vector.load %arg6[%c0_13, %c0_14] : memref<32x1xf32, #tpu.memory_space<vmem>>, vector<32x1xf32>
    %28 = vector.broadcast %27 : vector<32x1xf32> to vector<32x32xf32>
    %29 = arith.addf %26, %28 : vector<32x32xf32>
    %c0_15 = arith.constant 0 : index
    %c0_16 = arith.constant 0 : index
    %30 = vector.load %arg7[%c0_15, %c0_16] : memref<32x32xf32, #tpu.memory_space<vmem>>, vector<32x32xf32>
    tpu.vector_store %arg7[%c0_15, %c0_16], %29 {strides = array<i32>} : memref<32x32xf32, #tpu.memory_space<vmem>>, vector<32x32xf32>,
    return
  }
  func.func @transform_0(%arg0: i32) -> (i32, i32) {
    %c0_i32 = arith.constant 0 : i32
    %c0_i32_0 = arith.constant 0 : i32
    return %c0_i32, %arg0 : i32, i32
  }
  func.func @transform_1(%arg0: i32) -> (i32, i32) {
    %c0_i32 = arith.constant 0 : i32
    %c0_i32_0 = arith.constant 0 : i32
    %c0_i32_1 = arith.constant 0 : i32
    return %c0_i32, %c0_i32_0 : i32, i32
  }
  func.func @transform_2(%arg0: i32) -> (i32, i32) {
    %c0_i32 = arith.constant 0 : i32
    %c0_i32_0 = arith.constant 0 : i32
    %c0_i32_1 = arith.constant 0 : i32
    return %c0_i32, %c0_i32_0 : i32, i32
  }
  func.func @transform_3(%arg0: i32) -> (i32, i32) {
    %c0_i32 = arith.constant 0 : i32
    %c0_i32_0 = arith.constant 0 : i32
    %c0_i32_1 = arith.constant 0 : i32
    return %c0_i32, %c0_i32_0 : i32, i32
  }
  func.func @transform_4(%arg0: i32) -> (i32, i32) {
    %c0_i32 = arith.constant 0 : i32
    %c0_i32_0 = arith.constant 0 : i32
    %c0_i32_1 = arith.constant 0 : i32
    return %c0_i32, %c0_i32_0 : i32, i32
  }
  func.func @transform_5(%arg0: i32) -> (i32, i32) {
    %c0_i32 = arith.constant 0 : i32
    %c0_i32_0 = arith.constant 0 : i32
    %c0_i32_1 = arith.constant 0 : i32
    return %c0_i32, %c0_i32_0 : i32, i32
  }
  func.func @transform_6(%arg0: i32) -> (i32, i32) {
    %c0_i32 = arith.constant 0 : i32
    %c0_i32_0 = arith.constant 0 : i32
    return %c0_i32, %arg0 : i32, i32
  }
}

</mosaic_0001>

<llo_original>
// kernel: tpu_custom_call.1
$region0: #{tpu_custom_call.1}
  #allocation0 [shape = 'u32[]', space=smem, size = 0x4, offset = 0x4, fixed_abs, tag = 'smem constant byte address 0x4 - core index']
  #allocation1 [shape = 'u32[144,128]{1,0:T(1,128)}', space=vmem, size = 0x12000, scoped, tag = 'internal scratch']
  %s0 = inlined_call_operand.vmem [shape: f32[1,32], index: 0, kind: input, shape index: {}]
  %s1 = inlined_call_operand.vmem [shape: f32[64,16], index: 1, kind: input, shape index: {}]
  %s2 = inlined_call_operand.vmem [shape: f32[64,16], index: 2, kind: input, shape index: {}]
  %s3 = inlined_call_operand.vmem [shape: f32[64,1], index: 3, kind: input, shape index: {}]
  %s4 = inlined_call_operand.vmem [shape: f32[32,64], index: 4, kind: input, shape index: {}]
  %s5 = inlined_call_operand.vmem [shape: f32[32,1], index: 5, kind: input, shape index: {}]
  %s6 = inlined_call_operand.hbm [shape: f32[32,32], index: 6, kind: output, shape index: {}]
  %s7 = sld [smem:[#allocation0]]
  $region34: #{tpu_custom_call.1} parent=0
    _
  %s9 = ssub.s32 1, %s7
  %s10 = scalar_select 0, %s9, %s7
  $region1: #{tpu_custom_call.1} parent=0
    #allocation2 [shape = 'u8[16384]{0}', space=vmem, size = 0x4000, scoped, tag = 'output window, operand 0, single buffered']
    #allocation3 [shape = 's32[1]{0}', space=sflag, size = 0x4, scoped, tag = 'scoped memory for tpu_custom_call.1']
    %11 = vsyncpa [#allocation3], 0
    // Predicated region
    $region2: #{tpu_custom_call.1} parent=1 // pred_check
      _
    $region3: #{tpu_custom_call.1} parent=1 // pred_check_branch
      %13 = sbr.rel (0) target = $region5
    $region4: #{tpu_custom_call.1} parent=1 // pred_region
      _
    $region5: #{tpu_custom_call.1} parent=1 // pred_fallthru
      _
    // Predicated region
    $region6: #{tpu_custom_call.1} parent=1 // pred_check
      _
    $region7: #{tpu_custom_call.1} parent=1 // pred_check_branch
      %15 = sbr.rel (0) target = $region9
    $region8: #{tpu_custom_call.1} parent=1 // pred_region
      _
    $region9: #{tpu_custom_call.1} parent=1 // pred_fallthru
      _
    // Predicated region
    $region10: #{tpu_custom_call.1} parent=1 // pred_check
      _
    $region11: #{tpu_custom_call.1} parent=1 // pred_check_branch
      %17 = sbr.rel (0) target = $region13
    $region12: #{tpu_custom_call.1} parent=1 // pred_region
      _
    $region13: #{tpu_custom_call.1} parent=1 // pred_fallthru
      _
    // Predicated region
    $region14: #{tpu_custom_call.1} parent=1 // pred_check
      _
    $region15: #{tpu_custom_call.1} parent=1 // pred_check_branch
      %19 = sbr.rel (0) target = $region17
    $region16: #{tpu_custom_call.1} parent=1 // pred_region
      _
    $region17: #{tpu_custom_call.1} parent=1 // pred_fallthru
      _
    // Predicated region
    $region18: #{tpu_custom_call.1} parent=1 // pred_check
      _
    $region19: #{tpu_custom_call.1} parent=1 // pred_check_branch
      %21 = sbr.rel (0) target = $region21
    $region20: #{tpu_custom_call.1} parent=1 // pred_region
      _
    $region21: #{tpu_custom_call.1} parent=1 // pred_fallthru
      _
    // Predicated region
    $region22: #{tpu_custom_call.1} parent=1 // pred_check
      _
    $region23: #{tpu_custom_call.1} parent=1 // pred_check_branch
      %23 = sbr.rel (0) target = $region25
    $region24: #{tpu_custom_call.1} parent=1 // pred_region
      _
    $region25: #{tpu_custom_call.1} parent=1 // pred_fallthru
      _
    %v24 = vld [vmem:[%s0] sm:$0x1]
    %v25 = vlaneseq
    %v26 = vshrl.u32 %v25, 7
    %v27 = vadd.s32 %v26, 8
    %v28 = vcvt.s32.f32 %v26
    %v29 = vcvt.s32.f32 %v27
    %v30 = vmul.f32 %v28, -0.6140227
    %v31 = vmul.f32 %v29, -0.6140227
    %v32 = vmul.f32 %v30, 1.442695
    %v33 = vpow.pop %v32
    %v34 = vmul.f32 %v31, 1.442695
    %v35 = vpow.pop %v34
    %v37 = vlaneseq
    %v38 = vshrl.u32 %v37, 7
    %v39 = vsub.s32 0, %v38
    %v40 = vrot.slane %v24, %v39
    %v42 = vmul.f32 %v33, %v40
    %v43 = vmul.f32 %v35, %v40
    %v44 = vand.u32 2147483647, %v42
    %vm45 = vcmp.le.f32.partialorder %v44, 0.7853982
    %vm46 = vcmp.lt.s32.totalorder %v42, 0
    %v47 = vand.u32 %v42, 2139095040
    %v48 = vshrl.u32 %v47, 23
    %v49 = vsub.s32 %v48, 127
    %v50 = vand.u32 2147483647, %v42
    %v51 = vand.u32 %v50, 8388607
    %v52 = vor.u32 %v51, 8388608
    %v53 = vsub.s32 0, %v52
    %v54 = vadd.s32 %v49, 1
    %vm55 = vcmp.gt.s32.totalorder %v54, 0
    %v56 = vsel %vm55, %v54, 0
    %v57 = vshrl.u32 %v56, 5
    %v58 = vand.u32 %v56, 31
    %v59 = vsub.s32 32, %v58
    %v60 = vshrl.u32 683565275, %v59
    %v61 = vshll.u32 683565275, %v58
    %v62 = vshrl.u32 2475754826, %v59
    %v63 = vor.u32 %v61, %v62
    %v64 = vshll.u32 2475754826, %v58
    %v65 = vshrl.u32 2131351028, %v59
    %v66 = vor.u32 %v64, %v65
    %v67 = vshll.u32 2131351028, %v58
    %v68 = vshrl.u32 2102212464, %v59
    %v69 = vor.u32 %v67, %v68
    %v70 = vshll.u32 2102212464, %v58
    %v71 = vshrl.u32 920167782, %v59
    %v72 = vor.u32 %v70, %v71
    %v73 = vshll.u32 920167782, %v58
    %v74 = vshrl.u32 1326507024, %v59
    %v75 = vor.u32 %v73, %v74
    %vm76 = vcmp.lt.s32.totalorder %v57, 1
    %vm77 = vcmp.lt.s32.totalorder %v57, 2
    %vm78 = vcmp.lt.s32.totalorder %v57, 3
    %vm79 = vcmp.lt.s32.totalorder %v57, 4
    %v80 = vsel %vm76, %v60, %v63
    %v81 = vsel %vm79, %v69, 2102212464
    %v82 = vsel %vm78, %v66, %v81
    %v83 = vsel %vm77, %v80, %v82
    %v84 = vsel %vm76, %v63, %v66
    %v85 = vsel %vm79, %v72, 920167782
    %v86 = vsel %vm78, %v69, %v85
    %v87 = vsel %vm77, %v84, %v86
    %v88 = vsel %vm76, %v66, %v69
    %v89 = vsel %vm79, %v75, 1326507024
    %v90 = vsel %vm78, %v72, %v89
    %v91 = vsel %vm77, %v88, %v90
    %v92 = vshll.u32 %v52, 8
    %v93 = vmul.u32.u64.compose %v92, %v91
    %v94 = vextract.low.u32 %v93
    %v95 = vextract.high.u32 %v93
    %v96 = vmul.u32.u64.compose %v92, %v87
    %v97 = vextract.low.u32 %v96
    %v98 = vextract.high.u32 %v96
    %v99 = vmul.u32 %v92, %v83
    %v100 = vadd.s32 %v95, %v97
    %vm101 = vc.u32 %v95, %v97
    %v102 = vadd.s32 %v98, 1
    %v103 = vsel %vm101, %v102, %v98
    %v104 = vadd.s32 %v99, %v103
    %v105 = vadd.s32 %v104, 536870912
    %v106 = vshrl.u32 %v105, 30
    %v107 = vshll.u32 %v106, 30
    %v108 = vsub.s32 %v104, %v107
    %vm109 = vcmp.lt.s32.totalorder %v108, 0
    %v110 = vsub.s32 0, %v108
    %v111 = vsel %vm109, %v110, %v108
    %v112 = vclz %v111
    %v113 = vsub.s32 %v112, 2
    %vm114 = vcmp.gt.s32.totalorder 0, %v113
    %v115 = vsel %vm114, 0, %v113
    %v116 = vsub.s32 32, %v115
    %v117 = vshll.u32 %v108, %v115
    %v118 = vshrl.u32 %v100, %v116
    %v119 = vor.u32 %v117, %v118
    %v120 = vsub.s32 4294967266, %v115
    %v121 = vadd.s32 %v120, 127
    %v122 = vshll.u32 %v121, 23
    %v123 = vor.u32 4788187, %v122
    %v124 = vand.u32 2147483647, %v123
    %v126 = vcvt.s32.f32 %v119
    %v127 = vmul.f32 %v126, %v124
    %v128 = vxor.u32 %v127, 2147483648
    %v129 = vsel %vm46, %v128, %v127
    %v130 = vsub.s32 4, %v106
    %v131 = vsel %vm46, %v130, %v106
    %v132 = vsel %vm45, %v42, %v129
    %v133 = vsel %vm45, 0, %v131
    %v134 = vcosq.f32.pop %v132
    %v135 = vsinq.f32.pop %v132
    %vm136 = vweird.f32 %v42
    %v137 = vadd.s32 %v133, 3
    %v138 = vand.u32 %v137, 3
    %vm139 = vcmp.lt.s32.totalorder %v138, 2
    %vm140 = vcmp.eq.s32.totalorder %v138, 0
    %v141 = vxor.u32 %v135, 2147483648
    %v142 = vsel %vm140, %v134, %v141
    %vm143 = vcmp.eq.s32.totalorder %v138, 2
    %v144 = vxor.u32 %v134, 2147483648
    %v145 = vsel %vm143, %v144, %v135
    %v146 = vsel %vm139, %v142, %v145
    %v147 = vsel %vm136, nan, %v146
    %v148 = vand.u32 2147483647, %v43
    %vm149 = vcmp.le.f32.partialorder %v148, 0.7853982
    %vm150 = vcmp.lt.s32.totalorder %v43, 0
    %v151 = vand.u32 %v43, 2139095040
    %v152 = vshrl.u32 %v151, 23
    %v153 = vsub.s32 %v152, 127
    %v154 = vand.u32 2147483647, %v43
    %v155 = vand.u32 %v154, 8388607
    %v156 = vor.u32 %v155, 8388608
    %v157 = vsub.s32 0, %v156
    %v158 = vadd.s32 %v153, 1
    %vm159 = vcmp.gt.s32.totalorder %v158, 0
    %v160 = vsel %vm159, %v158, 0
    %v161 = vshrl.u32 %v160, 5
    %v162 = vand.u32 %v160, 31
    %v163 = vsub.s32 32, %v162
    %v164 = vshrl.u32 683565275, %v163
    %v165 = vshll.u32 683565275, %v162
    %v166 = vshrl.u32 2475754826, %v163
    %v167 = vor.u32 %v165, %v166
    %v168 = vshll.u32 2475754826, %v162
    %v169 = vshrl.u32 2131351028, %v163
    %v170 = vor.u32 %v168, %v169
    %v171 = vshll.u32 2131351028, %v162
    %v172 = vshrl.u32 2102212464, %v163
    %v173 = vor.u32 %v171, %v172
    %v174 = vshll.u32 2102212464, %v162
    %v175 = vshrl.u32 920167782, %v163
    %v176 = vor.u32 %v174, %v175
    %v177 = vshll.u32 920167782, %v162
    %v178 = vshrl.u32 1326507024, %v163
    %v179 = vor.u32 %v177, %v178
    %vm180 = vcmp.lt.s32.totalorder %v161, 1
    %vm181 = vcmp.lt.s32.totalorder %v161, 2
    %vm182 = vcmp.lt.s32.totalorder %v161, 3
    %vm183 = vcmp.lt.s32.totalorder %v161, 4
    %v184 = vsel %vm180, %v164, %v167
    %v185 = vsel %vm183, %v173, 2102212464
    %v186 = vsel %vm182, %v170, %v185
    %v187 = vsel %vm181, %v184, %v186
    %v188 = vsel %vm180, %v167, %v170
    %v189 = vsel %vm183, %v176, 920167782
    %v190 = vsel %vm182, %v173, %v189
    %v191 = vsel %vm181, %v188, %v190
    %v192 = vsel %vm180, %v170, %v173
    %v193 = vsel %vm183, %v179, 1326507024
    %v194 = vsel %vm182, %v176, %v193
    %v195 = vsel %vm181, %v192, %v194
    %v196 = vshll.u32 %v156, 8
    %v197 = vmul.u32.u64.compose %v196, %v195
    %v198 = vextract.low.u32 %v197
    %v199 = vextract.high.u32 %v197
    %v200 = vmul.u32.u64.compose %v196, %v191
    %v201 = vextract.low.u32 %v200
    %v202 = vextract.high.u32 %v200
    %v203 = vmul.u32 %v196, %v187
    %v204 = vadd.s32 %v199, %v201
    %vm205 = vc.u32 %v199, %v201
    %v206 = vadd.s32 %v202, 1
    %v207 = vsel %vm205, %v206, %v202
    %v208 = vadd.s32 %v203, %v207
    %v209 = vadd.s32 %v208, 536870912
    %v210 = vshrl.u32 %v209, 30
    %v211 = vshll.u32 %v210, 30
    %v212 = vsub.s32 %v208, %v211
    %vm213 = vcmp.lt.s32.totalorder %v212, 0
    %v214 = vsub.s32 0, %v212
    %v215 = vsel %vm213, %v214, %v212
    %v216 = vclz %v215
    %v217 = vsub.s32 %v216, 2
    %vm218 = vcmp.gt.s32.totalorder 0, %v217
    %v219 = vsel %vm218, 0, %v217
    %v220 = vsub.s32 32, %v219
    %v221 = vshll.u32 %v212, %v219
    %v222 = vshrl.u32 %v204, %v220
    %v223 = vor.u32 %v221, %v222
    %v224 = vsub.s32 4294967266, %v219
    %v225 = vadd.s32 %v224, 127
    %v226 = vshll.u32 %v225, 23
    %v227 = vor.u32 4788187, %v226
    %v228 = vand.u32 2147483647, %v227
    %v230 = vcvt.s32.f32 %v223
    %v231 = vmul.f32 %v230, %v228
    %v232 = vxor.u32 %v231, 2147483648
    %v233 = vsel %vm150, %v232, %v231
    %v234 = vsub.s32 4, %v210
    %v235 = vsel %vm150, %v234, %v210
    %v236 = vsel %vm149, %v43, %v233
    %v237 = vsel %vm149, 0, %v235
    %v238 = vcosq.f32.pop %v236
    %v239 = vsinq.f32.pop %v236
    %vm240 = vweird.f32 %v43
    %v241 = vadd.s32 %v237, 3
    %v242 = vand.u32 %v241, 3
    %vm243 = vcmp.lt.s32.totalorder %v242, 2
    %vm244 = vcmp.eq.s32.totalorder %v242, 0
    %v245 = vxor.u32 %v239, 2147483648
    %v246 = vsel %vm244, %v238, %v245
    %vm247 = vcmp.eq.s32.totalorder %v242, 2
    %v248 = vxor.u32 %v238, 2147483648
    %v249 = vsel %vm247, %v248, %v239
    %v250 = vsel %vm243, %v246, %v249
    %v251 = vsel %vm240, nan, %v250
    %v252 = vand.u32 2147483647, %v42
    %vm253 = vcmp.le.f32.partialorder %v252, 0.7853982
    %vm254 = vcmp.lt.s32.totalorder %v42, 0
    %v255 = vand.u32 %v42, 2139095040
    %v256 = vshrl.u32 %v255, 23
    %v257 = vsub.s32 %v256, 127
    %v258 = vand.u32 2147483647, %v42
    %v259 = vand.u32 %v258, 8388607
    %v260 = vor.u32 %v259, 8388608
    %v261 = vsub.s32 0, %v260
    %v262 = vadd.s32 %v257, 1
    %vm263 = vcmp.gt.s32.totalorder %v262, 0
    %v264 = vsel %vm263, %v262, 0
    %v265 = vshrl.u32 %v264, 5
    %v266 = vand.u32 %v264, 31
    %v267 = vsub.s32 32, %v266
    %v268 = vshrl.u32 683565275, %v267
    %v269 = vshll.u32 683565275, %v266
    %v270 = vshrl.u32 2475754826, %v267
    %v271 = vor.u32 %v269, %v270
    %v272 = vshll.u32 2475754826, %v266
    %v273 = vshrl.u32 2131351028, %v267
    %v274 = vor.u32 %v272, %v273
    %v275 = vshll.u32 2131351028, %v266
    %v276 = vshrl.u32 2102212464, %v267
    %v277 = vor.u32 %v275, %v276
    %v278 = vshll.u32 2102212464, %v266
    %v279 = vshrl.u32 920167782, %v267
    %v280 = vor.u32 %v278, %v279
    %v281 = vshll.u32 920167782, %v266
    %v282 = vshrl.u32 1326507024, %v267
    %v283 = vor.u32 %v281, %v282
    %vm284 = vcmp.lt.s32.totalorder %v265, 1
    %vm285 = vcmp.lt.s32.totalorder %v265, 2
    %vm286 = vcmp.lt.s32.totalorder %v265, 3
    %vm287 = vcmp.lt.s32.totalorder %v265, 4
    %v288 = vsel %vm284, %v268, %v271
    %v289 = vsel %vm287, %v277, 2102212464
    %v290 = vsel %vm286, %v274, %v289
    %v291 = vsel %vm285, %v288, %v290
    %v292 = vsel %vm284, %v271, %v274
    %v293 = vsel %vm287, %v280, 920167782
    %v294 = vsel %vm286, %v277, %v293
    %v295 = vsel %vm285, %v292, %v294
    %v296 = vsel %vm284, %v274, %v277
    %v297 = vsel %vm287, %v283, 1326507024
    %v298 = vsel %vm286, %v280, %v297
    %v299 = vsel %vm285, %v296, %v298
    %v300 = vshll.u32 %v260, 8
    %v301 = vmul.u32.u64.compose %v300, %v299
    %v302 = vextract.low.u32 %v301
    %v303 = vextract.high.u32 %v301
    %v304 = vmul.u32.u64.compose %v300, %v295
    %v305 = vextract.low.u32 %v304
    %v306 = vextract.high.u32 %v304
    %v307 = vmul.u32 %v300, %v291
    %v308 = vadd.s32 %v303, %v305
    %vm309 = vc.u32 %v303, %v305
    %v310 = vadd.s32 %v306, 1
    %v311 = vsel %vm309, %v310, %v306
    %v312 = vadd.s32 %v307, %v311
    %v313 = vadd.s32 %v312, 536870912
    %v314 = vshrl.u32 %v313, 30
    %v315 = vshll.u32 %v314, 30
    %v316 = vsub.s32 %v312, %v315
    %vm317 = vcmp.lt.s32.totalorder %v316, 0
    %v318 = vsub.s32 0, %v316
    %v319 = vsel %vm317, %v318, %v316
    %v320 = vclz %v319
    %v321 = vsub.s32 %v320, 2
    %vm322 = vcmp.gt.s32.totalorder 0, %v321
    %v323 = vsel %vm322, 0, %v321
    %v324 = vsub.s32 32, %v323
    %v325 = vshll.u32 %v316, %v323
    %v326 = vshrl.u32 %v308, %v324
    %v327 = vor.u32 %v325, %v326
    %v328 = vsub.s32 4294967266, %v323
    %v329 = vadd.s32 %v328, 127
    %v330 = vshll.u32 %v329, 23
    %v331 = vor.u32 4788187, %v330
    %v332 = vand.u32 2147483647, %v331
    %v334 = vcvt.s32.f32 %v327
    %v335 = vmul.f32 %v334, %v332
    %v336 = vxor.u32 %v335, 2147483648
    %v337 = vsel %vm254, %v336, %v335
    %v338 = vsub.s32 4, %v314
    %v339 = vsel %vm254, %v338, %v314
    %v340 = vsel %vm253, %v42, %v337
    %v341 = vsel %vm253, 0, %v339
    %v342 = vcosq.f32.pop %v340
    %v343 = vsinq.f32.pop %v340
    %vm344 = vweird.f32 %v42
    %v345 = vand.u32 %v341, 3
    %vm346 = vcmp.lt.s32.totalorder %v345, 2
    %vm347 = vcmp.eq.s32.totalorder %v345, 0
    %v348 = vxor.u32 %v343, 2147483648
    %v349 = vsel %vm347, %v342, %v348
    %vm350 = vcmp.eq.s32.totalorder %v345, 2
    %v351 = vxor.u32 %v342, 2147483648
    %v352 = vsel %vm350, %v351, %v343
    %v353 = vsel %vm346, %v349, %v352
    %v354 = vsel %vm344, nan, %v353
    %v355 = vand.u32 2147483647, %v43
    %vm356 = vcmp.le.f32.partialorder %v355, 0.7853982
    %vm357 = vcmp.lt.s32.totalorder %v43, 0
    %v358 = vand.u32 %v43, 2139095040
    %v359 = vshrl.u32 %v358, 23
    %v360 = vsub.s32 %v359, 127
    %v361 = vand.u32 2147483647, %v43
    %v362 = vand.u32 %v361, 8388607
    %v363 = vor.u32 %v362, 8388608
    %v364 = vsub.s32 0, %v363
    %v365 = vadd.s32 %v360, 1
    %vm366 = vcmp.gt.s32.totalorder %v365, 0
    %v367 = vsel %vm366, %v365, 0
    %v368 = vshrl.u32 %v367, 5
    %v369 = vand.u32 %v367, 31
    %v370 = vsub.s32 32, %v369
    %v371 = vshrl.u32 683565275, %v370
    %v372 = vshll.u32 683565275, %v369
    %v373 = vshrl.u32 2475754826, %v370
    %v374 = vor.u32 %v372, %v373
    %v375 = vshll.u32 2475754826, %v369
    %v376 = vshrl.u32 2131351028, %v370
    %v377 = vor.u32 %v375, %v376
    %v378 = vshll.u32 2131351028, %v369
    %v379 = vshrl.u32 2102212464, %v370
    %v380 = vor.u32 %v378, %v379
    %v381 = vshll.u32 2102212464, %v369
    %v382 = vshrl.u32 920167782, %v370
    %v383 = vor.u32 %v381, %v382
    %v384 = vshll.u32 920167782, %v369
    %v385 = vshrl.u32 1326507024, %v370
    %v386 = vor.u32 %v384, %v385
    %vm387 = vcmp.lt.s32.totalorder %v368, 1
    %vm388 = vcmp.lt.s32.totalorder %v368, 2
    %vm389 = vcmp.lt.s32.totalorder %v368, 3
    %vm390 = vcmp.lt.s32.totalorder %v368, 4
    %v391 = vsel %vm387, %v371, %v374
    %v392 = vsel %vm390, %v380, 2102212464
    %v393 = vsel %vm389, %v377, %v392
    %v394 = vsel %vm388, %v391, %v393
    %v395 = vsel %vm387, %v374, %v377
    %v396 = vsel %vm390, %v383, 920167782
    %v397 = vsel %vm389, %v380, %v396
    %v398 = vsel %vm388, %v395, %v397
    %v399 = vsel %vm387, %v377, %v380
    %v400 = vsel %vm390, %v386, 1326507024
    %v401 = vsel %vm389, %v383, %v400
    %v402 = vsel %vm388, %v399, %v401
    %v403 = vshll.u32 %v363, 8
    %v404 = vmul.u32.u64.compose %v403, %v402
    %v405 = vextract.low.u32 %v404
    %v406 = vextract.high.u32 %v404
    %v407 = vmul.u32.u64.compose %v403, %v398
    %v408 = vextract.low.u32 %v407
    %v409 = vextract.high.u32 %v407
    %v410 = vmul.u32 %v403, %v394
    %v411 = vadd.s32 %v406, %v408
    %vm412 = vc.u32 %v406, %v408
    %v413 = vadd.s32 %v409, 1
    %v414 = vsel %vm412, %v413, %v409
    %v415 = vadd.s32 %v410, %v414
    %v416 = vadd.s32 %v415, 536870912
    %v417 = vshrl.u32 %v416, 30
    %v418 = vshll.u32 %v417, 30
    %v419 = vsub.s32 %v415, %v418
    %vm420 = vcmp.lt.s32.totalorder %v419, 0
    %v421 = vsub.s32 0, %v419
    %v422 = vsel %vm420, %v421, %v419
    %v423 = vclz %v422
    %v424 = vsub.s32 %v423, 2
    %vm425 = vcmp.gt.s32.totalorder 0, %v424
    %v426 = vsel %vm425, 0, %v424
    %v427 = vsub.s32 32, %v426
    %v428 = vshll.u32 %v419, %v426
    %v429 = vshrl.u32 %v411, %v427
    %v430 = vor.u32 %v428, %v429
    %v431 = vsub.s32 4294967266, %v426
    %v432 = vadd.s32 %v431, 127
    %v433 = vshll.u32 %v432, 23
    %v434 = vor.u32 4788187, %v433
    %v435 = vand.u32 2147483647, %v434
    %v437 = vcvt.s32.f32 %v430
    %v438 = vmul.f32 %v437, %v435
    %v439 = vxor.u32 %v438, 2147483648
    %v440 = vsel %vm357, %v439, %v438
    %v441 = vsub.s32 4, %v417
    %v442 = vsel %vm357, %v441, %v417
    %v443 = vsel %vm356, %v43, %v440
    %v444 = vsel %vm356, 0, %v442
    %v445 = vcosq.f32.pop %v443
    %v446 = vsinq.f32.pop %v443
    %vm447 = vweird.f32 %v43
    %v448 = vand.u32 %v444, 3
    %vm449 = vcmp.lt.s32.totalorder %v448, 2
    %vm450 = vcmp.eq.s32.totalorder %v448, 0
    %v451 = vxor.u32 %v446, 2147483648
    %v452 = vsel %vm450, %v445, %v451
    %vm453 = vcmp.eq.s32.totalorder %v448, 2
    %v454 = vxor.u32 %v445, 2147483648
    %v455 = vsel %vm453, %v454, %v446
    %v456 = vsel %vm449, %v452, %v455
    %v457 = vsel %vm447, nan, %v456
    %v458 = vld [vmem:[%s1] sm:$0xff]
    %v459 = vld [vmem:[%s1 + $0x8] sm:$0xff]
    %v460 = vld [vmem:[%s1 + $0x10] sm:$0xff]
    %v461 = vld [vmem:[%s1 + $0x18] sm:$0xff]
    %v462 = vld [vmem:[%s1 + $0x20] sm:$0xff]
    %v463 = vld [vmem:[%s1 + $0x28] sm:$0xff]
    %v464 = vld [vmem:[%s1 + $0x30] sm:$0xff]
    %v465 = vld [vmem:[%s1 + $0x38] sm:$0xff]
    %v466 = vld [vmem:[%s2] sm:$0xff]
    %v467 = vld [vmem:[%s2 + $0x8] sm:$0xff]
    %v468 = vld [vmem:[%s2 + $0x10] sm:$0xff]
    %v469 = vld [vmem:[%s2 + $0x18] sm:$0xff]
    %v470 = vld [vmem:[%s2 + $0x20] sm:$0xff]
    %v471 = vld [vmem:[%s2 + $0x28] sm:$0xff]
    %v472 = vld [vmem:[%s2 + $0x30] sm:$0xff]
    %v473 = vld [vmem:[%s2 + $0x38] sm:$0xff]
    %vm474 = vcmask 130048
    %v476 = vsel %vm474, %v466, 0
    %v479 = vsel %vm474, %v467, 0
    %v482 = vsel %vm474, %v468, 0
    %v485 = vsel %vm474, %v469, 0
    %v488 = vsel %vm474, %v470, 0
    %v491 = vsel %vm474, %v471, 0
    %v494 = vsel %vm474, %v472, 0
    %v497 = vsel %vm474, %v473, 0
    %499 = vmatprep.subr.mxu0 0.0
    %500 = vmatpush1.msra.mxu0 %v354
    %501 = vmatprep.subr.mxu0 0.0
    %502 = vmatpush1.msra.mxu0 %v457
    %503 = vmatprep.subr.mxu0 0.0
    %504 = vmatpush1.msra.mxu0 0.0
    %505 = vmatprep.subr.mxu0 0.0
    %506 = vmatpush1.msra.mxu0 0.0
    %507 = vmatprep.subr.mxu0 0.0
    %508 = vmatpush1.msra.mxu0 0.0
    %509 = vmatprep.subr.mxu0 0.0
    %510 = vmatpush1.msra.mxu0 0.0
    %511 = vmatprep.subr.mxu0 0.0
    %512 = vmatpush1.msra.mxu0 0.0
    %513 = vmatprep.subr.mxu0 0.0
    %514 = vmatpush1.msra.mxu0 0.0
    %515 = vmatprep.subr.mxu0 0.0
    %516 = vmatpush1.msra.mxu0 0.0
    %517 = vmatprep.subr.mxu0 0.0
    %518 = vmatpush1.msra.mxu0 0.0
    %519 = vmatprep.subr.mxu0 0.0
    %520 = vmatpush1.msra.mxu0 0.0
    %521 = vmatprep.subr.mxu0 0.0
    %522 = vmatpush1.msra.mxu0 0.0
    %523 = vmatprep.subr.mxu0 0.0
    %524 = vmatpush1.msra.mxu0 0.0
    %525 = vmatprep.subr.mxu0 0.0
    %526 = vmatpush1.msra.mxu0 0.0
    %527 = vmatprep.subr.mxu0 0.0
    %528 = vmatpush1.msra.mxu0 0.0
    %529 = vmatprep.subr.mxu0 0.0
    %530 = vmatpush1.msra.mxu0 0.0
    %531 = vmatprep.subr.mxu0 0.0
    %532 = vmatpush1.msra.mxu0 0.0
    %533 = vmatprep.subr.mxu0 0.0
    %534 = vmatpush1.msra.mxu0 0.0
    %535 = vmatprep.subr.mxu0 0.0
    %536 = vmatpush1.msra.mxu0 0.0
    %537 = vmatprep.subr.mxu0 0.0
    %538 = vmatpush1.msra.mxu0 0.0
    %539 = vmatprep.subr.mxu0 0.0
    %540 = vmatpush1.msra.mxu0 0.0
    %541 = vmatprep.subr.mxu0 0.0
    %542 = vmatpush1.msra.mxu0 0.0
    %543 = vmatprep.subr.mxu0 0.0
    %544 = vmatpush1.msra.mxu0 0.0
    %545 = vmatprep.subr.mxu0 0.0
    %546 = vmatpush1.msra.mxu0 0.0
    %547 = vmatprep.subr.mxu0 0.0
    %548 = vmatpush1.msra.mxu0 0.0
    %549 = vmatprep.subr.mxu0 0.0
    %550 = vmatpush1.msra.mxu0 0.0
    %551 = vmatprep.subr.mxu0 0.0
    %552 = vmatpush1.msra.mxu0 0.0
    %553 = vmatprep.subr.mxu0 0.0
    %554 = vmatpush1.msra.mxu0 0.0
    %555 = vmatprep.subr.mxu0 0.0
    %556 = vmatpush1.msra.mxu0 0.0
    %557 = vmatprep.subr.mxu0 0.0
    %558 = vmatpush1.msra.mxu0 0.0
    %559 = vmatprep.subr.mxu0 0.0
    %560 = vmatpush1.msra.mxu0 0.0
    %561 = vmatprep.subr.mxu0 0.0
    %562 = vmatpush1.msra.mxu0 0.0
    %563 = vmatprep.mubr.f32.mxu0 0.0
    %564 = vmatmul.mubr.f32.gmra.mrb[0].mxu0 %v476
    %v565 = vpop.f32.mrb[0].mxu0
    %v566 = vadd.f32 0.0, %v565
    %v567 = vpop.f32.mrb[0].mxu0
    %568 = vmatprep.mubr.f32.mxu0 0.0
    %569 = vmatmul.mubr.f32.gmra.mrb[0].mxu0 %v479
    %v570 = vpop.f32.mrb[0].mxu0
    %v571 = vadd.f32 0.0, %v570
    %v572 = vpop.f32.mrb[0].mxu0
    %573 = vmatprep.mubr.f32.mxu0 0.0
    %574 = vmatmul.mubr.f32.gmra.mrb[0].mxu0 %v482
    %v575 = vpop.f32.mrb[0].mxu0
    %v576 = vadd.f32 0.0, %v575
    %v577 = vpop.f32.mrb[0].mxu0
    %578 = vmatprep.mubr.f32.mxu0 0.0
    %579 = vmatmul.mubr.f32.gmra.mrb[0].mxu0 %v485
    %v580 = vpop.f32.mrb[0].mxu0
    %v581 = vadd.f32 0.0, %v580
    %v582 = vpop.f32.mrb[0].mxu0
    %583 = vmatprep.mubr.f32.mxu0 0.0
    %584 = vmatmul.mubr.f32.gmra.mrb[0].mxu0 %v488
    %v585 = vpop.f32.mrb[0].mxu0
    %v586 = vadd.f32 0.0, %v585
    %v587 = vpop.f32.mrb[0].mxu0
    %588 = vmatprep.mubr.f32.mxu0 0.0
    %589 = vmatmul.mubr.f32.gmra.mrb[0].mxu0 %v491
    %v590 = vpop.f32.mrb[0].mxu0
    %v591 = vadd.f32 0.0, %v590
    %v592 = vpop.f32.mrb[0].mxu0
    %593 = vmatprep.mubr.f32.mxu0 0.0
    %594 = vmatmul.mubr.f32.gmra.mrb[0].mxu0 %v494
    %v595 = vpop.f32.mrb[0].mxu0
    %v596 = vadd.f32 0.0, %v595
    %v597 = vpop.f32.mrb[0].mxu0
    %598 = vmatprep.mubr.f32.mxu0 0.0
    %599 = vmatmul.mubr.f32.gmra.mrb[0].mxu0 %v497
    %v600 = vpop.f32.mrb[0].mxu0
    %v601 = vadd.f32 0.0, %v600
    %v602 = vpop.f32.mrb[0].mxu0
    %603 = vdwg.mxu0
    %v605 = vsel %vm474, %v458, 0
    %v608 = vsel %vm474, %v459, 0
    %v611 = vsel %vm474, %v460, 0
    %v614 = vsel %vm474, %v461, 0
    %v617 = vsel %vm474, %v462, 0
    %v620 = vsel %vm474, %v463, 0
    %v623 = vsel %vm474, %v464, 0
    %v626 = vsel %vm474, %v465, 0
    %628 = vmatprep.subr.mxu0 0.0
    %629 = vmatpush1.msra.mxu0 %v147
    %630 = vmatprep.subr.mxu0 0.0
    %631 = vmatpush1.msra.mxu0 %v251
    %632 = vmatprep.subr.mxu0 0.0
    %633 = vmatpush1.msra.mxu0 0.0
    %634 = vmatprep.subr.mxu0 0.0
    %635 = vmatpush1.msra.mxu0 0.0
    %636 = vmatprep.subr.mxu0 0.0
    %637 = vmatpush1.msra.mxu0 0.0
    %638 = vmatprep.subr.mxu0 0.0
    %639 = vmatpush1.msra.mxu0 0.0
    %640 = vmatprep.subr.mxu0 0.0
    %641 = vmatpush1.msra.mxu0 0.0
    %642 = vmatprep.subr.mxu0 0.0
    %643 = vmatpush1.msra.mxu0 0.0
    %644 = vmatprep.subr.mxu0 0.0
    %645 = vmatpush1.msra.mxu0 0.0
    %646 = vmatprep.subr.mxu0 0.0
    %647 = vmatpush1.msra.mxu0 0.0
    %648 = vmatprep.subr.mxu0 0.0
    %649 = vmatpush1.msra.mxu0 0.0
    %650 = vmatprep.subr.mxu0 0.0
    %651 = vmatpush1.msra.mxu0 0.0
    %652 = vmatprep.subr.mxu0 0.0
    %653 = vmatpush1.msra.mxu0 0.0
    %654 = vmatprep.subr.mxu0 0.0
    %655 = vmatpush1.msra.mxu0 0.0
    %656 = vmatprep.subr.mxu0 0.0
    %657 = vmatpush1.msra.mxu0 0.0
    %658 = vmatprep.subr.mxu0 0.0
    %659 = vmatpush1.msra.mxu0 0.0
    %660 = vmatprep.subr.mxu0 0.0
    %661 = vmatpush1.msra.mxu0 0.0
    %662 = vmatprep.subr.mxu0 0.0
    %663 = vmatpush1.msra.mxu0 0.0
    %664 = vmatprep.subr.mxu0 0.0
    %665 = vmatpush1.msra.mxu0 0.0
    %666 = vmatprep.subr.mxu0 0.0
    %667 = vmatpush1.msra.mxu0 0.0
    %668 = vmatprep.subr.mxu0 0.0
    %669 = vmatpush1.msra.mxu0 0.0
    %670 = vmatprep.subr.mxu0 0.0
    %671 = vmatpush1.msra.mxu0 0.0
    %672 = vmatprep.subr.mxu0 0.0
    %673 = vmatpush1.msra.mxu0 0.0
    %674 = vmatprep.subr.mxu0 0.0
    %675 = vmatpush1.msra.mxu0 0.0
    %676 = vmatprep.subr.mxu0 0.0
    %677 = vmatpush1.msra.mxu0 0.0
    %678 = vmatprep.subr.mxu0 0.0
    %679 = vmatpush1.msra.mxu0 0.0
    %680 = vmatprep.subr.mxu0 0.0
    %681 = vmatpush1.msra.mxu0 0.0
    %682 = vmatprep.subr.mxu0 0.0
    %683 = vmatpush1.msra.mxu0 0.0
    %684 = vmatprep.subr.mxu0 0.0
    %685 = vmatpush1.msra.mxu0 0.0
    %686 = vmatprep.subr.mxu0 0.0
    %687 = vmatpush1.msra.mxu0 0.0
    %688 = vmatprep.subr.mxu0 0.0
    %689 = vmatpush1.msra.mxu0 0.0
    %690 = vmatprep.subr.mxu0 0.0
    %691 = vmatpush1.msra.mxu0 0.0
    %692 = vmatprep.mubr.f32.mxu0 0.0
    %693 = vmatmul.mubr.f32.gmra.mrb[0].mxu0 %v605
    %v694 = vpop.f32.mrb[0].mxu0
    %v695 = vadd.f32 %v566, %v694
    %v696 = vpop.f32.mrb[0].mxu0
    %697 = vmatprep.mubr.f32.mxu0 0.0
    %698 = vmatmul.mubr.f32.gmra.mrb[0].mxu0 %v608
    %v699 = vpop.f32.mrb[0].mxu0
    %v700 = vadd.f32 %v571, %v699
    %v701 = vpop.f32.mrb[0].mxu0
    %702 = vmatprep.mubr.f32.mxu0 0.0
    %703 = vmatmul.mubr.f32.gmra.mrb[0].mxu0 %v611
    %v704 = vpop.f32.mrb[0].mxu0
    %v705 = vadd.f32 %v576, %v704
    %v706 = vpop.f32.mrb[0].mxu0
    %707 = vmatprep.mubr.f32.mxu0 0.0
    %708 = vmatmul.mubr.f32.gmra.mrb[0].mxu0 %v614
    %v709 = vpop.f32.mrb[0].mxu0
    %v710 = vadd.f32 %v581, %v709
    %v711 = vpop.f32.mrb[0].mxu0
    %712 = vmatprep.mubr.f32.mxu0 0.0
    %713 = vmatmul.mubr.f32.gmra.mrb[0].mxu0 %v617
    %v714 = vpop.f32.mrb[0].mxu0
    %v715 = vadd.f32 %v586, %v714
    %v716 = vpop.f32.mrb[0].mxu0
    %717 = vmatprep.mubr.f32.mxu0 0.0
    %718 = vmatmul.mubr.f32.gmra.mrb[0].mxu0 %v620
    %v719 = vpop.f32.mrb[0].mxu0
    %v720 = vadd.f32 %v591, %v719
    %v721 = vpop.f32.mrb[0].mxu0
    %722 = vmatprep.mubr.f32.mxu0 0.0
    %723 = vmatmul.mubr.f32.gmra.mrb[0].mxu0 %v623
    %v724 = vpop.f32.mrb[0].mxu0
    %v725 = vadd.f32 %v596, %v724
    %v726 = vpop.f32.mrb[0].mxu0
    %727 = vmatprep.mubr.f32.mxu0 0.0
    %728 = vmatmul.mubr.f32.gmra.mrb[0].mxu0 %v626
    %v729 = vpop.f32.mrb[0].mxu0
    %v730 = vadd.f32 %v601, %v729
    %v731 = vpop.f32.mrb[0].mxu0
    %732 = vdwg.mxu0
    %v733 = vld [vmem:[%s3] sm:$0xff]
    %v734 = vld [vmem:[%s3 + $0x8] sm:$0xff]
    %v735 = vld [vmem:[%s3 + $0x10] sm:$0xff]
    %v736 = vld [vmem:[%s3 + $0x18] sm:$0xff]
    %v737 = vld [vmem:[%s3 + $0x20] sm:$0xff]
    %v738 = vld [vmem:[%s3 + $0x28] sm:$0xff]
    %v739 = vld [vmem:[%s3 + $0x30] sm:$0xff]
    %v740 = vld [vmem:[%s3 + $0x38] sm:$0xff]
    %742 = vset.pattern.permute.xlu0 0
    %743 = vperm.xlu0 %742, %v733
    %v744 = vpop.permute.xlu0 %743
    %747 = vset.pattern.permute.xlu0 0
    %748 = vperm.xlu0 %747, %v734
    %v749 = vpop.permute.xlu0 %748
    %752 = vset.pattern.permute.xlu0 0
    %753 = vperm.xlu0 %752, %v735
    %v754 = vpop.permute.xlu0 %753
    %757 = vset.pattern.permute.xlu0 0
    %758 = vperm.xlu0 %757, %v736
    %v759 = vpop.permute.xlu0 %758
    %762 = vset.pattern.permute.xlu0 0
    %763 = vperm.xlu0 %762, %v737
    %v764 = vpop.permute.xlu0 %763
    %767 = vset.pattern.permute.xlu0 0
    %768 = vperm.xlu0 %767, %v738
    %v769 = vpop.permute.xlu0 %768
    %772 = vset.pattern.permute.xlu0 0
    %773 = vperm.xlu0 %772, %v739
    %v774 = vpop.permute.xlu0 %773
    %777 = vset.pattern.permute.xlu0 0
    %778 = vperm.xlu0 %777, %v740
    %v779 = vpop.permute.xlu0 %778
    %v781 = vadd.f32 %v695, %v744
    %v782 = vadd.f32 %v700, %v749
    %v783 = vadd.f32 %v705, %v754
    %v784 = vadd.f32 %v710, %v759
    %v785 = vadd.f32 %v715, %v764
    %v786 = vadd.f32 %v720, %v769
    %v787 = vadd.f32 %v725, %v774
    %v788 = vadd.f32 %v730, %v779
    %v789 = vxor.u32 %v781, 2147483648
    %v790 = vxor.u32 %v782, 2147483648
    %v791 = vxor.u32 %v783, 2147483648
    %v792 = vxor.u32 %v784, 2147483648
    %v793 = vxor.u32 %v785, 2147483648
    %v794 = vxor.u32 %v786, 2147483648
    %v795 = vxor.u32 %v787, 2147483648
    %v796 = vxor.u32 %v788, 2147483648
    %v797 = vmul.f32 %v789, 1.442695
    %v798 = vpow.pop %v797
    %v799 = vmul.f32 %v790, 1.442695
    %v800 = vpow.pop %v799
    %v801 = vmul.f32 %v791, 1.442695
    %v802 = vpow.pop %v801
    %v803 = vmul.f32 %v792, 1.442695
    %v804 = vpow.pop %v803
    %v805 = vmul.f32 %v793, 1.442695
    %v806 = vpow.pop %v805
    %v807 = vmul.f32 %v794, 1.442695
    %v808 = vpow.pop %v807
    %v809 = vmul.f32 %v795, 1.442695
    %v810 = vpow.pop %v809
    %v811 = vmul.f32 %v796, 1.442695
    %v812 = vpow.pop %v811
    %v813 = vadd.f32 %v798, 1.0
    %v814 = vadd.f32 %v800, 1.0
    %v815 = vadd.f32 %v802, 1.0
    %v816 = vadd.f32 %v804, 1.0
    %v817 = vadd.f32 %v806, 1.0
    %v818 = vadd.f32 %v808, 1.0
    %v819 = vadd.f32 %v810, 1.0
    %v820 = vadd.f32 %v812, 1.0
    %v821 = vrcp.pop %v813
    %v822 = vmul.f32 1.0, %v821
    %v823 = vrcp.pop %v814
    %v824 = vmul.f32 1.0, %v823
    %v825 = vrcp.pop %v815
    %v826 = vmul.f32 1.0, %v825
    %v827 = vrcp.pop %v816
    %v828 = vmul.f32 1.0, %v827
    %v829 = vrcp.pop %v817
    %v830 = vmul.f32 1.0, %v829
    %v831 = vrcp.pop %v818
    %v832 = vmul.f32 1.0, %v831
    %v833 = vrcp.pop %v819
    %v834 = vmul.f32 1.0, %v833
    %v835 = vrcp.pop %v820
    %v836 = vmul.f32 1.0, %v835
    %v837 = vmul.f32 %v781, %v822
    %v838 = vmul.f32 %v782, %v824
    %v839 = vmul.f32 %v783, %v826
    %v840 = vmul.f32 %v784, %v828
    %v841 = vmul.f32 %v785, %v830
    %v842 = vmul.f32 %v786, %v832
    %v843 = vmul.f32 %v787, %v834
    %v844 = vmul.f32 %v788, %v836
    %v845 = vld [vmem:[%s4] sm:$0xff]
    %v846 = vld [vmem:[%s4 + $0x8] sm:$0xff]
    %v847 = vld [vmem:[%s4 + $0x10] sm:$0xff]
    %v848 = vld [vmem:[%s4 + $0x18] sm:$0xff]
    %v849 = vld [vmem:[%s5] sm:$0xff]
    %v850 = vld [vmem:[%s5 + $0x8] sm:$0xff]
    %v851 = vld [vmem:[%s5 + $0x10] sm:$0xff]
    %v852 = vld [vmem:[%s5 + $0x18] sm:$0xff]
    %854 = vset.pattern.permute.xlu0 0
    %855 = vperm.xlu0 %854, %v849
    %v856 = vpop.permute.xlu0 %855
    %859 = vset.pattern.permute.xlu0 0
    %860 = vperm.xlu0 %859, %v850
    %v861 = vpop.permute.xlu0 %860
    %864 = vset.pattern.permute.xlu0 0
    %865 = vperm.xlu0 %864, %v851
    %v866 = vpop.permute.xlu0 %865
    %869 = vset.pattern.permute.xlu0 0
    %870 = vperm.xlu0 %869, %v852
    %v871 = vpop.permute.xlu0 %870
    %vm873 = vcmask 523264
    %v875 = vsel %vm873, %v845, 0
    %v878 = vsel %vm873, %v846, 0
    %v881 = vsel %vm873, %v847, 0
    %v884 = vsel %vm873, %v848, 0
    %886 = vmatprep.subr.mxu0 0.0
    %887 = vmatpush1.msra.mxu0 %v837
    %888 = vmatprep.subr.mxu0 0.0
    %889 = vmatpush1.msra.mxu0 %v838
    %890 = vmatprep.subr.mxu0 0.0
    %891 = vmatpush1.msra.mxu0 %v839
    %892 = vmatprep.subr.mxu0 0.0
    %893 = vmatpush1.msra.mxu0 %v840
    %894 = vmatprep.subr.mxu0 0.0
    %895 = vmatpush1.msra.mxu0 %v841
    %896 = vmatprep.subr.mxu0 0.0
    %897 = vmatpush1.msra.mxu0 %v842
    %898 = vmatprep.subr.mxu0 0.0
    %899 = vmatpush1.msra.mxu0 %v843
    %900 = vmatprep.subr.mxu0 0.0
    %901 = vmatpush1.msra.mxu0 %v844
    %902 = vmatprep.subr.mxu0 0.0
    %903 = vmatpush1.msra.mxu0 0.0
    %904 = vmatprep.subr.mxu0 0.0
    %905 = vmatpush1.msra.mxu0 0.0
    %906 = vmatprep.subr.mxu0 0.0
    %907 = vmatpush1.msra.mxu0 0.0
    %908 = vmatprep.subr.mxu0 0.0
    %909 = vmatpush1.msra.mxu0 0.0
    %910 = vmatprep.subr.mxu0 0.0
    %911 = vmatpush1.msra.mxu0 0.0
    %912 = vmatprep.subr.mxu0 0.0
    %913 = vmatpush1.msra.mxu0 0.0
    %914 = vmatprep.subr.mxu0 0.0
    %915 = vmatpush1.msra.mxu0 0.0
    %916 = vmatprep.subr.mxu0 0.0
    %917 = vmatpush1.msra.mxu0 0.0
    %918 = vmatprep.subr.mxu0 0.0
    %919 = vmatpush1.msra.mxu0 0.0
    %920 = vmatprep.subr.mxu0 0.0
    %921 = vmatpush1.msra.mxu0 0.0
    %922 = vmatprep.subr.mxu0 0.0
    %923 = vmatpush1.msra.mxu0 0.0
    %924 = vmatprep.subr.mxu0 0.0
    %925 = vmatpush1.msra.mxu0 0.0
    %926 = vmatprep.subr.mxu0 0.0
    %927 = vmatpush1.msra.mxu0 0.0
    %928 = vmatprep.subr.mxu0 0.0
    %929 = vmatpush1.msra.mxu0 0.0
    %930 = vmatprep.subr.mxu0 0.0
    %931 = vmatpush1.msra.mxu0 0.0
    %932 = vmatprep.subr.mxu0 0.0
    %933 = vmatpush1.msra.mxu0 0.0
    %934 = vmatprep.subr.mxu0 0.0
    %935 = vmatpush1.msra.mxu0 0.0
    %936 = vmatprep.subr.mxu0 0.0
    %937 = vmatpush1.msra.mxu0 0.0
    %938 = vmatprep.subr.mxu0 0.0
    %939 = vmatpush1.msra.mxu0 0.0
    %940 = vmatprep.subr.mxu0 0.0
    %941 = vmatpush1.msra.mxu0 0.0
    %942 = vmatprep.subr.mxu0 0.0
    %943 = vmatpush1.msra.mxu0 0.0
    %944 = vmatprep.subr.mxu0 0.0
    %945 = vmatpush1.msra.mxu0 0.0
    %946 = vmatprep.subr.mxu0 0.0
    %947 = vmatpush1.msra.mxu0 0.0
    %948 = vmatprep.subr.mxu0 0.0
    %949 = vmatpush1.msra.mxu0 0.0
    %950 = vmatprep.mubr.f32.mxu0 0.0
    %951 = vmatmul.mubr.f32.gmra.mrb[0].mxu0 %v875
    %v952 = vpop.f32.mrb[0].mxu0
    %v953 = vadd.f32 %v856, %v952
    %v954 = vpop.f32.mrb[0].mxu0
    %955 = vmatprep.mubr.f32.mxu0 0.0
    %956 = vmatmul.mubr.f32.gmra.mrb[0].mxu0 %v878
    %v957 = vpop.f32.mrb[0].mxu0
    %v958 = vadd.f32 %v861, %v957
    %v959 = vpop.f32.mrb[0].mxu0
    %960 = vmatprep.mubr.f32.mxu0 0.0
    %961 = vmatmul.mubr.f32.gmra.mrb[0].mxu0 %v881
    %v962 = vpop.f32.mrb[0].mxu0
    %v963 = vadd.f32 %v866, %v962
    %v964 = vpop.f32.mrb[0].mxu0
    %965 = vmatprep.mubr.f32.mxu0 0.0
    %966 = vmatmul.mubr.f32.gmra.mrb[0].mxu0 %v884
    %v967 = vpop.f32.mrb[0].mxu0
    %v968 = vadd.f32 %v871, %v967
    %v969 = vpop.f32.mrb[0].mxu0
    %970 = vdwg.mxu0
    %vm971 = vcmask 261120
    %972 = vst.msk [vmem:[#allocation2] sm:$0xff] %vm971, %v953
    %973 = vst.msk [vmem:[#allocation2 + $0x8] sm:$0xff] %vm971, %v958
    %974 = vst.msk [vmem:[#allocation2 + $0x10] sm:$0xff] %vm971, %v963
    %975 = vst.msk [vmem:[#allocation2 + $0x18] sm:$0xff] %vm971, %v968
    // Predicated region
    $region26: #{tpu_custom_call.1} parent=1 // pred_check
      _
    $region27: #{tpu_custom_call.1} parent=1 // pred_check_branch
      %977 = sbr.rel (0) target = $region29
    $region28: #{tpu_custom_call.1} parent=1 // pred_region
      %s979 = ssub.s32 512, 512
      %980 = vsyncadd [#allocation3], %s979
      %s981 = sshll.u32 [#allocation2], 4
      %s982 = int_to_ptr.vmem [resolvable:$true] %s981
      %987 = dma.vmem_to_hbm [thread:$0]  %s982, 512, %s6, [#allocation3], 128, 128, 8
    $region29: #{tpu_custom_call.1} parent=1 // pred_fallthru
      _
    // Predicated region
    $region30: #{tpu_custom_call.1} parent=1 // pred_check
      _
    $region31: #{tpu_custom_call.1} parent=1 // pred_check_branch
      %989 = sbr.rel (0) target = $region33
    $region32: #{tpu_custom_call.1} parent=1 // pred_region
      %990 = dma.done [#allocation3], 512
    $region33: #{tpu_custom_call.1} parent=1 // pred_fallthru
      _
    %991 = vsyncpa [#allocation3], 1

</llo_original>
